<compile_context>
chip_gen: v7x
topology: tpu7x:2x2x1
jax: 0.10.0
libtpu: 0.0.40
codegen_flags: <defaults>
</compile_context>

<pallas_src>
import functools

import jax
import jax.numpy as jnp
import numpy as np
from jax import lax
from jax.experimental import pallas as pl
from jax.experimental.pallas import tpu as pltpu


def _cdiv(a, b):
    return (a + b - 1) // b


def _round_up(n, m):
    return _cdiv(n, m) * m


def _vmem_limit_bytes():
    """Generation-aware scoped-VMEM limit (v5e/v6e: 96 MiB, v7x: 48 MiB)."""
    cap = None
    try:
        cap = getattr(pltpu.get_tpu_info(), "vmem_capacity_bytes", None)
    except Exception:
        cap = None
    if not cap:
        cap = 64 * 1024 * 1024          # conservative: v7x per-TC VMEM
    return int(min((cap * 3) // 4, 96 * 1024 * 1024))


def _classify_row_tile(n_rows, cN, itemsize, n_streams, vmem_limit):
    """Biggest row tile that fits the VMEM budget (2 pipeline buffers per
    streamed input + ~4 full-width f32 temporaries), multiple of 8."""
    c_phys = _round_up(cN, 128)                 # physical lane padding in VMEM
    tile_budget = vmem_limit // 2               # headroom for compiler scratch
    per_row = c_phys * (n_streams * 2 * itemsize + 4 * 4)
    tn = max(8, min(2048, (tile_budget // per_row) // 8 * 8))
    # keep >=2 grid steps so the "parallel" axis can feed both v7x TensorCores
    tn = min(tn, max(8, _round_up(_cdiv(n_rows, 2), 8)))
    return tn
    # TODO(synk): for cN so large that even 8 rows overflow VMEM, a column-tiled
    # (online-softmax) variant would be needed.


# --------------------------------------------------------------------------- #
# Kernel 1a: classification term, one-hot targets (labels streamed, not target)
# --------------------------------------------------------------------------- #
def _classify_onehot_kernel(simclass_ref, labels_ref, out_ref, *, s, m, N, TN):
    sc = simclass_ref[...].astype(jnp.float32)           # (TN, cN)
    lbl = labels_ref[...]                                 # (TN, 1) int32
    tn, c = sc.shape

    col = lax.broadcasted_iota(jnp.int32, (tn, c), 1)
    is_lbl = col == lbl                                   # lane-broadcast compare

    logits = jnp.float32(s) * sc - jnp.float32(s * m) * is_lbl.astype(jnp.float32)
    mx = jnp.max(logits, axis=-1, keepdims=True)
    shifted = logits - mx
    lse = jnp.log(jnp.sum(jnp.exp(shifted), axis=-1, keepdims=True))

    # one-hot target: sum_c(-t * log_softmax) = lse - shifted[label]
    picked = jnp.sum(jnp.where(is_lbl, shifted, 0.0), axis=-1, keepdims=True)
    per_row = lse - picked

    # mask ragged last block (rows >= N hold undefined data)
    row_g = pl.program_id(0) * TN + lax.broadcasted_iota(jnp.int32, (tn, 1), 0)
    per_row = jnp.where(row_g < N, per_row, 0.0)

    out_ref[...] = jnp.full(out_ref.shape, jnp.sum(per_row), dtype=jnp.float32)


# --------------------------------------------------------------------------- #
# Kernel 1b: classification term for general (soft / multi-hot) targets.
# --------------------------------------------------------------------------- #
def _classify_dense_kernel(simclass_ref, target_ref, out_ref, *, s, m, N, TN):
    sc = simclass_ref[...].astype(jnp.float32)            # (TN, cN)
    tgt = target_ref[...].astype(jnp.float32)              # (TN, cN)
    tn, c = sc.shape

    col = lax.broadcasted_iota(jnp.int32, (tn, c), 1)
    # torch.argmax emulation (first max index wins).
    row_max = jnp.max(tgt, axis=-1, keepdims=True)
    fold = jnp.min(jnp.where(tgt >= row_max, col, c), axis=-1, keepdims=True)
    onehot = (col == fold).astype(jnp.float32)

    logits = jnp.float32(s) * (sc - jnp.float32(m) * onehot)
    mx = jnp.max(logits, axis=-1, keepdims=True)
    shifted = logits - mx
    lse = jnp.log(jnp.sum(jnp.exp(shifted), axis=-1, keepdims=True))

    tsum = jnp.sum(tgt, axis=-1, keepdims=True)
    per_row = lse * tsum - jnp.sum(tgt * shifted, axis=-1, keepdims=True)

    row_g = pl.program_id(0) * TN + lax.broadcasted_iota(jnp.int32, (tn, 1), 0)
    per_row = jnp.where(row_g < N, per_row, 0.0)

    out_ref[...] = jnp.full(out_ref.shape, jnp.sum(per_row), dtype=jnp.float32)


# --------------------------------------------------------------------------- #
# Kernel 2: regularizer over the diagonal band of simCenter.
# --------------------------------------------------------------------------- #
def _reg_kernel(simcenter_ref, out_ref, *, K, M, TB):
    simc = simcenter_ref[...].astype(jnp.float32)          # (TB, TB)
    i = pl.program_id(0)
    j = pl.program_id(1)

    row_l = lax.broadcasted_iota(jnp.int32, (TB, TB), 0)
    col_l = lax.broadcasted_iota(jnp.int32, (TB, TB), 1)
    row_g = row_l + i * TB
    col_g = col_l + (i + j) * TB          # unclamped: clamped blocks fully mask out

    # class id = floor((idx + 0.5) / K); exact in f32 for idx << 2**23
    # (asserted M < 2**22 in the wrapper); avoids vector integer division.
    inv_k = jnp.float32(1.0 / K)
    row_cls = jnp.floor((row_g.astype(jnp.float32) + 0.5) * inv_k)
    col_cls = jnp.floor((col_g.astype(jnp.float32) + 0.5) * inv_k)

    intra = (row_cls == col_cls) & (col_g > row_g) & (row_g < M) & (col_g < M)

    arg = jnp.where(intra, 2.0 + 1e-5 - 2.0 * simc, 0.0)
    arg = jnp.maximum(arg, 0.0)   # behavioral note: guards sqrt if sim > 1 + 5e-6
    out_ref[...] = jnp.full(out_ref.shape, jnp.sum(jnp.sqrt(arg)),
                            dtype=jnp.float32)


# --------------------------------------------------------------------------- #
# Wrapper
# --------------------------------------------------------------------------- #
@functools.partial(jax.jit,
                   static_argnames=("cN", "K", "s", "tau", "m", "assume_one_hot"))
def soft_triple_loss(simclass, target, simcenter, *, cN, K,
                     s=30.0, tau=0.2, m=0.35, assume_one_hot=True, labels=None):
    N = simclass.shape[0]
    M = cN * K
    assert simclass.shape[1] == cN
    assert simcenter.shape == (M, M)
    vmem_limit = _vmem_limit_bytes()

    # ---- classification term: row-tiled, no wrapper-side padding -----------
    n_streams = 1 if assume_one_hot else 2
    itemsize = jnp.dtype(simclass.dtype).itemsize
    tn = _classify_row_tile(N, cN, itemsize, n_streams, vmem_limit)
    g_cls = _cdiv(N, tn)

    cparams_cls = pltpu.CompilerParams(dimension_semantics=("parallel",),
                                       vmem_limit_bytes=vmem_limit)
    cls_cost = pl.CostEstimate(
        flops=int(6 * N * cN),
        transcendentals=int(N * cN + N),
        bytes_accessed=int(n_streams * N * cN * itemsize + N * 4
                           + g_cls * 8 * 128 * 4))
    out_shape = jax.ShapeDtypeStruct((g_cls, 8, 128), jnp.float32)
    out_spec = pl.BlockSpec((1, 8, 128), lambda i: (i, 0, 0))

    if assume_one_hot:
        if labels is None:
            labels = jnp.argmax(target, axis=1)
        lbl2d = labels.astype(jnp.int32).reshape(N, 1)
        cls_partials = pl.pallas_call(
            functools.partial(_classify_onehot_kernel,
                              s=float(s), m=float(m), N=N, TN=tn),
            out_shape=out_shape,
            grid=(g_cls,),
            in_specs=[pl.BlockSpec((tn, cN), lambda i: (i, 0)),
                      pl.BlockSpec((tn, 1), lambda i: (i, 0))],
            out_specs=out_spec,
            compiler_params=cparams_cls,
            cost_estimate=cls_cost,
        )(simclass, lbl2d)
    else:
        cls_partials = pl.pallas_call(
            functools.partial(_classify_dense_kernel,
                              s=float(s), m=float(m), N=N, TN=tn),
            out_shape=out_shape,
            grid=(g_cls,),
            in_specs=[pl.BlockSpec((tn, cN), lambda i: (i, 0)),
                      pl.BlockSpec((tn, cN), lambda i: (i, 0))],
            out_specs=out_spec,
            compiler_params=cparams_cls,
            cost_estimate=cls_cost,
        )(simclass, target)

    loss_classify = jnp.sum(cls_partials[:, 0, 0]) / jnp.float32(N)

    if not (tau > 0 and K > 1):
        return None   # matches the PyTorch module's bare `return`

    # ---- regularizer: diagonal band of simCenter, no wrapper-side padding ---
    assert M < (1 << 22), "f32 floor class-id trick requires cN*K < 2**22"
    TB = min(512, _round_up(M, 128))            # budgeted multiple of 128 (not lcm(K,128))
    g_rows = _cdiv(M, TB)
    # column tiles needed per row tile: 1 if class blocks never straddle tiles,
    # otherwise also the adjacent tile(s) to the right.
    jband = 1 if TB % K == 0 else ((TB + K - 2) // TB + 1)
    last_col_block = g_rows - 1
    sc_itemsize = jnp.dtype(simcenter.dtype).itemsize
    reg_cost = pl.CostEstimate(
        flops=int(6 * g_rows * jband * TB * TB),
        transcendentals=int(g_rows * jband * TB * TB),
        bytes_accessed=int(g_rows * jband * TB * TB * sc_itemsize
                           + g_rows * jband * 8 * 128 * 4))

    reg_partials = pl.pallas_call(
        functools.partial(_reg_kernel, K=K, M=M, TB=TB),
        out_shape=jax.ShapeDtypeStruct((g_rows, jband, 8, 128), jnp.float32),
        grid=(g_rows, jband),
        in_specs=[pl.BlockSpec(
            (TB, TB), lambda i, j: (i, jnp.minimum(i + j, last_col_block)))],
        out_specs=pl.BlockSpec((1, 1, 8, 128), lambda i, j: (i, j, 0, 0)),
        compiler_params=pltpu.CompilerParams(
            dimension_semantics=("parallel", "arbitrary"),
            vmem_limit_bytes=vmem_limit),
        cost_estimate=reg_cost,
    )(simcenter)
    reg = jnp.sum(reg_partials[:, :, 0, 0]) / jnp.float32(cN * K * (K - 1.0))

    return loss_classify + jnp.float32(tau) * reg


# --------------------------------------------------------------------------- #
# Reference + test
# --------------------------------------------------------------------------- #
def _build_mask_np(cN, K):
    w = np.zeros((cN * K, cN * K), dtype=np.float32)
    for i in range(cN):
        for j in range(K):
            w[i * K + j, i * K + j + 1:(i + 1) * K] = 1.0
    return w


def _reference(simclass, target, simcenter, mask, *, cN, K, s, tau, m):
    fold = jnp.argmax(target, axis=1)
    onehot = jax.nn.one_hot(fold, simclass.shape[1], dtype=jnp.float32)
    pred = jax.nn.log_softmax(s * (simclass - onehot * m), axis=-1)
    loss_cls = jnp.mean(jnp.sum(-target * pred, axis=-1))
    arg = jnp.where(mask > 0, 2.0 + 1e-5 - 2.0 * simcenter, 0.0)
    reg = jnp.sum(jnp.sqrt(arg)) / (cN * K * (K - 1.0))
    return loss_cls + tau * reg


if __name__ == "__main__":
    N, cN, K = 8, 4, 3
    s_, tau_, m_ = 30.0, 0.2, 0.35

    key = jax.random.PRNGKey(0)
    k1, k2, k3 = jax.random.split(key, 3)

    # sample-to-class similarities in [-1, 1]
    simclass = jnp.tanh(jax.random.normal(k1, (N, cN), dtype=jnp.float32))

    # one-hot targets
    lbls = jax.random.randint(k2, (N,), 0, cN)
    target = jax.nn.one_hot(lbls, cN, dtype=jnp.float32)

    # center-to-center cosine similarities
    centers = jax.random.normal(k3, (cN * K, 16), dtype=jnp.float32)
    centers = centers / jnp.linalg.norm(centers, axis=-1, keepdims=True)
    simcenter = centers @ centers.T              # (cN*K, cN*K)

    ref = _reference(simclass, target, simcenter,
                     jnp.asarray(_build_mask_np(cN, K)),
                     cN=cN, K=K, s=s_, tau=tau_, m=m_)

    # fast path: one-hot targets, dense target never streamed through the kernel
    loss = soft_triple_loss(simclass, target, simcenter,
                            cN=cN, K=K, s=s_, tau=tau_, m=m_)
    loss = jax.block_until_ready(loss)
    assert jnp.allclose(loss, ref, rtol=1e-5, atol=1e-5), (loss, ref)

    # general path: soft / multi-hot targets streamed densely
    loss_dense = soft_triple_loss(simclass, target, simcenter,
                                  cN=cN, K=K, s=s_, tau=tau_, m=m_,
                                  assume_one_hot=False)
    loss_dense = jax.block_until_ready(loss_dense)
    assert jnp.allclose(loss_dense, ref, rtol=1e-5, atol=1e-5), (loss_dense, ref)

    print("KERNEL_OK")
</pallas_src>

<mosaic_0001>
module attributes {stable_mosaic.version = 11 : i64} {
  func.func @_classify_onehot_kernel(%arg0: i32, %arg1: memref<8x4xf32, #tpu.memory_space<vmem>>, %arg2: memref<8x1xi32, #tpu.memory_space<vmem>>, %arg3: memref<1x8x128xf32, #tpu.memory_space<vmem>>) attributes {dimension_semantics = [#tpu.dimension_semantics<parallel>], iteration_bounds = array<i64: 1>, scalar_prefetch = 0 : i64, scratch_operands = 0 : i64, tpu.core_type = #tpu.core_type<tc>, window_params = [{transform_indices = @transform_0, window_bounds = array<i64: 8, 4>}, {transform_indices = @transform_1, window_bounds = array<i64: 8, 1>}, {transform_indices = @transform_2, window_bounds = array<i64: 1, 8, 128>}]} {
    %c0 = arith.constant 0 : index
    %c0_0 = arith.constant 0 : index
    %0 = vector.load %arg1[%c0, %c0_0] : memref<8x4xf32, #tpu.memory_space<vmem>>, vector<8x4xf32>
    %c0_1 = arith.constant 0 : index
    %c0_2 = arith.constant 0 : index
    %1 = vector.load %arg2[%c0_1, %c0_2] : memref<8x1xi32, #tpu.memory_space<vmem>>, vector<8x1xi32>
    %2 = tpu.iota {dimensions = array<i32: 1>} : vector<8x4xi32>
    %3 = vector.broadcast %1 : vector<8x1xi32> to vector<8x4xi32>
    %4 = arith.cmpi eq, %2, %3 : vector<8x4xi32>
    %cst = arith.constant 3.000000e+01 : f32
    %5 = vector.broadcast %cst : f32 to vector<8x4xf32>
    %6 = arith.mulf %5, %0 : vector<8x4xf32>
    %7 = arith.extui %4 : vector<8x4xi1> to vector<8x4xi32>
    %8 = arith.sitofp %7 : vector<8x4xi32> to vector<8x4xf32>
    %cst_3 = arith.constant 1.050000e+01 : f32
    %9 = vector.broadcast %cst_3 : f32 to vector<8x4xf32>
    %10 = arith.mulf %9, %8 : vector<8x4xf32>
    %11 = arith.subf %6, %10 : vector<8x4xf32>
    %cst_4 = arith.constant dense<0xFF800000> : vector<8xf32>
    %12 = vector.multi_reduction <maximumf>, %11, %cst_4 [1] : vector<8x4xf32> to vector<8xf32>
    %13 = vector.shape_cast %12 : vector<8xf32> to vector<8x1xf32>
    %14 = vector.broadcast %13 : vector<8x1xf32> to vector<8x4xf32>
    %15 = arith.subf %11, %14 : vector<8x4xf32>
    %16 = math.exp %15 : vector<8x4xf32>
    %cst_5 = arith.constant dense<0.000000e+00> : vector<8xf32>
    %17 = vector.multi_reduction <add>, %16, %cst_5 [1] : vector<8x4xf32> to vector<8xf32>
    %18 = vector.shape_cast %17 : vector<8xf32> to vector<8x1xf32>
    %19 = math.log %18 : vector<8x1xf32>
    %cst_6 = arith.constant 0.000000e+00 : f32
    %20 = vector.broadcast %cst_6 : f32 to vector<8x4xf32>
    %21 = arith.select %4, %15, %20 : vector<8x4xi1>, vector<8x4xf32>
    %cst_7 = arith.constant dense<0.000000e+00> : vector<8xf32>
    %22 = vector.multi_reduction <add>, %21, %cst_7 [1] : vector<8x4xf32> to vector<8xf32>
    %23 = vector.shape_cast %22 : vector<8xf32> to vector<8x1xf32>
    %24 = arith.subf %19, %23 : vector<8x1xf32>
    %c8_i32 = arith.constant 8 : i32
    %25 = arith.muli %arg0, %c8_i32 : i32
    %26 = tpu.iota {dimensions = array<i32: 0>} : vector<8x1xi32>
    %27 = vector.broadcast %25 : i32 to vector<8x1xi32>
    %28 = arith.addi %27, %26 : vector<8x1xi32>
    %c8_i32_8 = arith.constant 8 : i32
    %29 = vector.broadcast %c8_i32_8 : i32 to vector<8x1xi32>
    %30 = arith.cmpi slt, %28, %29 : vector<8x1xi32>
    %cst_9 = arith.constant 0.000000e+00 : f32
    %31 = vector.broadcast %cst_9 : f32 to vector<8x1xf32>
    %32 = arith.select %30, %24, %31 : vector<8x1xi1>, vector<8x1xf32>
    %33 = vector.shape_cast %32 : vector<8x1xf32> to vector<1x8x1xf32>
    %cst_10 = arith.constant dense<0.000000e+00> : vector<1xf32>
    %34 = vector.multi_reduction <add>, %33, %cst_10 [1, 2] : vector<1x8x1xf32> to vector<1xf32>
    %35 = vector.shape_cast %34 : vector<1xf32> to vector<1x1x1xf32>
    %36 = vector.extract %35[0, 0, 0] : f32 from vector<1x1x1xf32>
    %37 = vector.broadcast %36 : f32 to vector<1x8x128xf32>
    %c0_11 = arith.constant 0 : index
    %c0_12 = arith.constant 0 : index
    %c0_13 = arith.constant 0 : index
    %38 = vector.load %arg3[%c0_11, %c0_12, %c0_13] : memref<1x8x128xf32, #tpu.memory_space<vmem>>, vector<1x8x128xf32>
    tpu.vector_store %arg3[%c0_11, %c0_12, %c0_13], %37 {strides = array<i32>} : memref<1x8x128xf32, #tpu.memory_space<vmem>>, vector<1x8x128xf32>,
    return
  }
  func.func @transform_0(%arg0: i32) -> (i32, i32) {
    %c0_i32 = arith.constant 0 : i32
    %c0_i32_0 = arith.constant 0 : i32
    return %arg0, %c0_i32 : i32, i32
  }
  func.func @transform_1(%arg0: i32) -> (i32, i32) {
    %c0_i32 = arith.constant 0 : i32
    %c0_i32_0 = arith.constant 0 : i32
    return %arg0, %c0_i32 : i32, i32
  }
  func.func @transform_2(%arg0: i32) -> (i32, i32, i32) {
    %c0_i32 = arith.constant 0 : i32
    %c0_i32_0 = arith.constant 0 : i32
    %c0_i32_1 = arith.constant 0 : i32
    return %arg0, %c0_i32, %c0_i32_0 : i32, i32, i32
  }
}

module attributes {stable_mosaic.version = 11 : i64} {
  func.func @_reg_kernel(%arg0: i32, %arg1: i32, %arg2: memref<128x128xf32, #tpu.memory_space<vmem>>, %arg3: memref<1x1x8x128xf32, #tpu.memory_space<vmem>>) attributes {dimension_semantics = [#tpu.dimension_semantics<parallel>, #tpu.dimension_semantics<arbitrary>], iteration_bounds = array<i64: 1, 2>, scalar_prefetch = 0 : i64, scratch_operands = 0 : i64, tpu.core_type = #tpu.core_type<tc>, window_params = [{transform_indices = @transform_0, window_bounds = array<i64: 128, 128>}, {transform_indices = @transform_1, window_bounds = array<i64: 1, 1, 8, 128>}]} {
    %c0 = arith.constant 0 : index
    %c0_0 = arith.constant 0 : index
    %0 = vector.load %arg2[%c0, %c0_0] : memref<128x128xf32, #tpu.memory_space<vmem>>, vector<128x128xf32>
    %1 = tpu.iota {dimensions = array<i32: 0>} : vector<128x128xi32>
    %2 = tpu.iota {dimensions = array<i32: 1>} : vector<128x128xi32>
    %c128_i32 = arith.constant 128 : i32
    %3 = arith.muli %arg0, %c128_i32 : i32
    %4 = vector.broadcast %3 : i32 to vector<128x128xi32>
    %5 = arith.addi %1, %4 : vector<128x128xi32>
    %6 = arith.addi %arg0, %arg1 : i32
    %c128_i32_1 = arith.constant 128 : i32
    %7 = arith.muli %6, %c128_i32_1 : i32
    %8 = vector.broadcast %7 : i32 to vector<128x128xi32>
    %9 = arith.addi %2, %8 : vector<128x128xi32>
    %10 = arith.sitofp %5 : vector<128x128xi32> to vector<128x128xf32>
    %cst = arith.constant 5.000000e-01 : f32
    %11 = vector.broadcast %cst : f32 to vector<128x128xf32>
    %12 = arith.addf %10, %11 : vector<128x128xf32>
    %cst_2 = arith.constant 0.333333343 : f32
    %13 = vector.broadcast %cst_2 : f32 to vector<128x128xf32>
    %14 = arith.mulf %12, %13 : vector<128x128xf32>
    %15 = math.floor %14 : vector<128x128xf32>
    %16 = arith.sitofp %9 : vector<128x128xi32> to vector<128x128xf32>
    %cst_3 = arith.constant 5.000000e-01 : f32
    %17 = vector.broadcast %cst_3 : f32 to vector<128x128xf32>
    %18 = arith.addf %16, %17 : vector<128x128xf32>
    %cst_4 = arith.constant 0.333333343 : f32
    %19 = vector.broadcast %cst_4 : f32 to vector<128x128xf32>
    %20 = arith.mulf %18, %19 : vector<128x128xf32>
    %21 = math.floor %20 : vector<128x128xf32>
    %22 = arith.cmpf oeq, %15, %21 : vector<128x128xf32>
    %23 = arith.cmpi sgt, %9, %5 : vector<128x128xi32>
    %24 = arith.andi %22, %23 : vector<128x128xi1>
    %c12_i32 = arith.constant 12 : i32
    %25 = vector.broadcast %c12_i32 : i32 to vector<128x128xi32>
    %26 = arith.cmpi slt, %5, %25 : vector<128x128xi32>
    %27 = arith.andi %24, %26 : vector<128x128xi1>
    %c12_i32_5 = arith.constant 12 : i32
    %28 = vector.broadcast %c12_i32_5 : i32 to vector<128x128xi32>
    %29 = arith.cmpi slt, %9, %28 : vector<128x128xi32>
    %30 = arith.andi %27, %29 : vector<128x128xi1>
    %cst_6 = arith.constant 2.000000e+00 : f32
    %31 = vector.broadcast %cst_6 : f32 to vector<128x128xf32>
    %32 = arith.mulf %31, %0 : vector<128x128xf32>
    %cst_7 = arith.constant 2.000010e+00 : f32
    %33 = vector.broadcast %cst_7 : f32 to vector<128x128xf32>
    %34 = arith.subf %33, %32 : vector<128x128xf32>
    %cst_8 = arith.constant 0.000000e+00 : f32
    %35 = vector.broadcast %cst_8 : f32 to vector<128x128xf32>
    %36 = arith.select %30, %34, %35 : vector<128x128xi1>, vector<128x128xf32>
    %cst_9 = arith.constant 0.000000e+00 : f32
    %37 = vector.broadcast %cst_9 : f32 to vector<128x128xf32>
    %38 = arith.maximumf %36, %37 : vector<128x128xf32>
    %39 = math.sqrt %38 : vector<128x128xf32>
    %40 = vector.shape_cast %39 : vector<128x128xf32> to vector<1x128x128xf32>
    %cst_10 = arith.constant dense<0.000000e+00> : vector<1xf32>
    %41 = vector.multi_reduction <add>, %40, %cst_10 [1, 2] : vector<1x128x128xf32> to vector<1xf32>
    %42 = vector.shape_cast %41 : vector<1xf32> to vector<1x1x1xf32>
    %43 = vector.extract %42[0, 0, 0] : f32 from vector<1x1x1xf32>
    %44 = vector.broadcast %43 : f32 to vector<1x1x8x128xf32>
    %c0_11 = arith.constant 0 : index
    %c0_12 = arith.constant 0 : index
    %c0_13 = arith.constant 0 : index
    %c0_14 = arith.constant 0 : index
    %45 = vector.load %arg3[%c0_11, %c0_12, %c0_13, %c0_14] : memref<1x1x8x128xf32, #tpu.memory_space<vmem>>, vector<1x1x8x128xf32>
    tpu.vector_store %arg3[%c0_11, %c0_12, %c0_13, %c0_14], %44 {strides = array<i32>} : memref<1x1x8x128xf32, #tpu.memory_space<vmem>>, vector<1x1x8x128xf32>,
    return
  }
  func.func @transform_0(%arg0: i32, %arg1: i32) -> (i32, i32) {
    %0 = arith.addi %arg0, %arg1 : i32
    %c0_i32 = arith.constant 0 : i32
    %1 = arith.minsi %0, %c0_i32 : i32
    %c0_i32_0 = arith.constant 0 : i32
    return %arg0, %1 : i32, i32
  }
  func.func @transform_1(%arg0: i32, %arg1: i32) -> (i32, i32, i32, i32) {
    %c0_i32 = arith.constant 0 : i32
    %c0_i32_0 = arith.constant 0 : i32
    %c0_i32_1 = arith.constant 0 : i32
    return %arg0, %arg1, %c0_i32, %c0_i32_0 : i32, i32, i32, i32
  }
}

</mosaic_0001>

<llo_original>
// kernel: soft_triple_loss.2
$region0: #{soft_triple_loss.2}
  #allocation0 [shape = 'u32[]', space=smem, size = 0x4, offset = 0x4, fixed_abs, tag = 'smem constant byte address 0x4 - core index']
  #allocation1 [shape = 'u32[144,128]{1,0:T(1,128)}', space=vmem, size = 0x12000, scoped, tag = 'internal scratch']
  %s0 = inlined_call_operand.vmem [shape: f32[8,4], index: 0, kind: input, shape index: {}]
  %s1 = inlined_call_operand.vmem [shape: s32[8,1], index: 1, kind: input, shape index: {}]
  %s2 = inlined_call_operand.vmem [shape: f32[1,8,128], index: 2, kind: output, shape index: {}]
  %s3 = sld [smem:[#allocation0]]
  $region18: #{soft_triple_loss.2} parent=0
    _
  %s5 = ssub.s32 1, %s3
  %s6 = scalar_select 0, %s5, %s3
  // Predicated region
  $region2: #{soft_triple_loss.2} parent=0 // pred_check
    _
  $region3: #{soft_triple_loss.2} parent=0 // pred_check_branch
    %8 = sbr.rel (0) target = $region5
  $region4: #{soft_triple_loss.2} parent=0 // pred_region
    _
  $region5: #{soft_triple_loss.2} parent=0 // pred_fallthru
    _
  // Predicated region
  $region6: #{soft_triple_loss.2} parent=0 // pred_check
    _
  $region7: #{soft_triple_loss.2} parent=0 // pred_check_branch
    %10 = sbr.rel (0) target = $region9
  $region8: #{soft_triple_loss.2} parent=0 // pred_region
    _
  $region9: #{soft_triple_loss.2} parent=0 // pred_fallthru
    _
  %v11 = vld [vmem:[%s0] sm:$0xff]
  %v12 = vld [vmem:[%s1] sm:$0xff]
  %v13 = vlaneseq
  %v14 = vand.u32 %v13, 127
  %15 = vset.pattern.permute.xlu0 0
  %16 = vperm.xlu0 %15, %v12
  %v17 = vpop.permute.xlu0 %16
  %vm18 = vcmp.eq.s32.totalorder %v14, %v17
  %v19 = vmul.f32 %v11, 30.0
  %v20 = vsel %vm18, 1, 0
  %v21 = vcvt.s32.f32 %v20
  %v22 = vmul.f32 %v21, 10.5
  %v23 = vsub.f32 %v19, %v22
  %vm24 = vcmask 31744
  %v25 = vsel %vm24, %v23, -inf
  %26 = vmax.xlane.f32.xlu0 %v25
  %v27 = vpop.xlane.xlu0 %26
  %v28 = vsub.f32 %v23, %v27
  %v29 = vmul.f32 %v28, 1.442695
  %v30 = vpow.pop %v29
  %v31 = vsel %vm24, %v30, 0.0
  %32 = vadd.xlane.f32.xlu0 %v31
  %v33 = vpop.xlane.xlu0 %32
  %v34 = vlog2.pop %v33
  %v35 = vmul.f32 %v34, 0.6931472
  %v36 = vsel %vm18, %v28, 0.0
  %v37 = vsel %vm24, %v36, 0.0
  %38 = vadd.xlane.f32.xlu0 %v37
  %v39 = vpop.xlane.xlu0 %38
  %v40 = vsub.f32 %v35, %v39
  %s41 = smul.u32 0, 8
  %v42 = vlaneseq
  %v43 = vshrl.u32 %v42, 7
  %v44 = vstv %s41
  %v45 = vadd.s32 %v44, %v43
  %vm46 = vcmp.lt.s32.totalorder %v45, 8
  %v47 = vsel %vm46, %v40, 0.0
  %vm48 = vcmask 7168
  %v49 = vsel %vm48, %v47, 0.0
  %50 = vadd.xlane.f32.xlu0 %v49
  %v51 = vpop.xlane.xlu0 %50
  %v52 = vrot.slane %v51, 4
  %v53 = vadd.f32 %v51, %v52
  %v54 = vrot.slane %v53, 2
  %v55 = vadd.f32 %v53, %v54
  %v56 = vrot.slane %v55, 1
  %v57 = vadd.f32 %v55, %v56
  %s58 = vtos %v57
  %v59 = vstv %s58
  %60 = vst [vmem:[%s2] sm:$0xff] %v59
  // Predicated region
  $region10: #{soft_triple_loss.2} parent=0 // pred_check
    _
  $region11: #{soft_triple_loss.2} parent=0 // pred_check_branch
    %62 = sbr.rel (0) target = $region13
  $region12: #{soft_triple_loss.2} parent=0 // pred_region
    _
  $region13: #{soft_triple_loss.2} parent=0 // pred_fallthru
    _
  // Predicated region
  $region14: #{soft_triple_loss.2} parent=0 // pred_check
    _
  $region15: #{soft_triple_loss.2} parent=0 // pred_check_branch
    %64 = sbr.rel (0) target = $region17
  $region16: #{soft_triple_loss.2} parent=0 // pred_region
    _
  $region17: #{soft_triple_loss.2} parent=0 // pred_fallthru
    _

// kernel: soft_triple_loss.3
$region0: #{soft_triple_loss.3}
  #allocation0 [shape = 'u32[]', space=smem, size = 0x4, offset = 0x4, fixed_abs, tag = 'smem constant byte address 0x4 - core index']
  #allocation1 [shape = 'u32[144,128]{1,0:T(1,128)}', space=vmem, size = 0x12000, scoped, tag = 'internal scratch']
  %s0 = inlined_call_operand.vmem [shape: f32[12,12], index: 0, kind: input, shape index: {}]
  %s1 = inlined_call_operand.vmem [shape: f32[1,2,8,128], index: 1, kind: output, shape index: {}]
  %s2 = sld [smem:[#allocation0]]
  $region37: #{soft_triple_loss.3} parent=0
    _
  %s4 = ssub.s32 1, %s2
  %s5 = scalar_select 0, %s4, %s2
  loop: start=0, step=1, limit=4
  $region2: #{soft_triple_loss.3} parent=0 // loop_pre_header
    _
  $region3: #{soft_triple_loss.3} parent=0 // loop_header
    %s7 = sphi 0, %s11
    %p8 = scmp.ge.s32.totalorder %s7, 4
    %s14 = sphi 0, %s26
    %s15 = sphi 0, %s22
    %s16 = sphi 0, %s14
    %s17 = sphi 0, %s15
    %s18 = sphi 0, %s16
    %s19 = sphi 0, %s17
    %s37 = sphi 0, %s39
    %s40 = sphi 0, %s37
    %s41 = sphi 0, %s40
    %s57 = sphi 0, %s41
    %s65 = sphi 0, %s67
    %s68 = sphi 0, %s65
    %s69 = sphi 0, %s68
    %s85 = sphi 0, %s69
  $region4: #{soft_triple_loss.3} parent=0 // loop_header_branch
    %10 = sbr.rel (%p8) target = $region8
  $region5: #{soft_triple_loss.3} parent=0 // loop_body
    %s12 = ssub.s32 %s7, 1
    %s13 = ssub.s32 %s7, 2
    %s20 = sadd.s32 1, %s15
    %p21 = scmp.ge.s32.totalorder %s20, 2
    %s22 = scalar_select %p21, 0, %s20
    %s23 = sadd.s32 1, %s14
    %s24 = scalar_select %p21, %s23, %s14
    %p25 = scmp.ge.s32.totalorder %s24, 1
    %s26 = scalar_select %p25, 0, %s24
    %s27 = sadd.s32 %s14, %s15
    %p28 = scmp.lt.s32.totalorder %s27, 0
    %s29 = scalar_select %p28, %s27, 0
    %s30 = sadd.s32 %s26, %s22
    %p31 = scmp.lt.s32.totalorder %s30, 0
    %s32 = scalar_select %p31, %s30, 0
    %s33 = ssub.s32 %s14, %s26
    %s34 = ssub.s32 %s29, %s32
    %s35 = sor.u32 %s33, %s34
    %p36 = scmp.eq.s32.totalorder %s35, 0
    %s38 = sadd.s32 %s37, 1
    %s39 = scalar_select %p36, %s37, %s38
    %p42 = pneg %p36
    %p43 = scmp.eq.s32.totalorder %s7, 1
    %p44 = por %p42, %p43
    %p45 = scmp.ne.s32.totalorder %s37, %s40
    %p46 = scmp.eq.s32.totalorder %s7, 0
    %p47 = por %p45, %p46
    %p48 = scmp.ne.s32.totalorder %s37, %s40
    %p49 = scmp.eq.s32.totalorder %s12, 1
    %p50 = por %p48, %p49
    %p51 = scmp.ne.s32.totalorder %s40, %s41
    %p52 = scmp.eq.s32.totalorder %s12, 0
    %p53 = por %p51, %p52
    %p54 = scmp.ne.s32.totalorder %s40, %s41
    %p55 = scmp.eq.s32.totalorder %s13, 1
    %p56 = por %p54, %p55
    %p58 = scmp.ne.s32.totalorder %s41, %s57
    %p59 = scmp.eq.s32.totalorder %s13, 0
    %p60 = por %p58, %p59
    %s61 = ssub.s32 %s14, %s26
    %s62 = ssub.s32 %s15, %s22
    %s63 = sor.u32 %s61, %s62
    %p64 = scmp.eq.s32.totalorder %s63, 0
    %s66 = sadd.s32 %s65, 1
    %s67 = scalar_select %p64, %s65, %s66
    %p70 = pneg %p64
    %p71 = scmp.eq.s32.totalorder %s7, 1
    %p72 = por %p70, %p71
    %p73 = scmp.ne.s32.totalorder %s65, %s68
    %p74 = scmp.eq.s32.totalorder %s7, 0
    %p75 = por %p73, %p74
    %p76 = scmp.ne.s32.totalorder %s65, %s68
    %p77 = scmp.eq.s32.totalorder %s12, 1
    %p78 = por %p76, %p77
    %p79 = scmp.ne.s32.totalorder %s68, %s69
    %p80 = scmp.eq.s32.totalorder %s12, 0
    %p81 = por %p79, %p80
    %p82 = scmp.ne.s32.totalorder %s68, %s69
    %p83 = scmp.eq.s32.totalorder %s13, 1
    %p84 = por %p82, %p83
    %p86 = scmp.ne.s32.totalorder %s69, %s85
    %p87 = scmp.eq.s32.totalorder %s13, 0
    %p88 = por %p86, %p87
    %p89 = scmp.le.s32.totalorder 1, %s7
    %p90 = scmp.lt.s32.totalorder %s7, 3
    %p91 = pnand %p89, %p90
    %p92 = pneg %p91
    // Predicated region
    $region9: #{soft_triple_loss.3} parent=5 // pred_check
      _
    $region10: #{soft_triple_loss.3} parent=5 // pred_check_branch
      %94 = sbr.rel (%p91) target = $region12
    $region11: #{soft_triple_loss.3} parent=5 // pred_region
      %s95 = ssub.s32 %s7, 1
    $region12: #{soft_triple_loss.3} parent=5 // pred_fallthru
      _
    %p96 = scmp.lt.s32.totalorder %s7, 2
    // Predicated region
    $region13: #{soft_triple_loss.3} parent=5 // pred_check
      %p97 = pneg %p96
    $region14: #{soft_triple_loss.3} parent=5 // pred_check_branch
      %99 = sbr.rel (%p97) target = $region16
    $region15: #{soft_triple_loss.3} parent=5 // pred_region
      // Predicated region
      $region17: #{soft_triple_loss.3} parent=15 // pred_check
        %p100 = pneg %p47
      $region18: #{soft_triple_loss.3} parent=15 // pred_check_branch
        %102 = sbr.rel (%p100) target = $region20
      $region19: #{soft_triple_loss.3} parent=15 // pred_region
        %s103 = sadd.s32 %s14, %s15
        %p104 = scmp.lt.s32.totalorder %s103, 0
        %s105 = scalar_select %p104, %s103, 0
        %s106 = smul.u32 16, %s14
        %s107 = ssub.s32 2, %s106
        %s108 = smul.u32 128, %s107
        %p109 = scmp.lt.s32.totalorder %s106, 1
        %s110 = scalar_select %p109, %s106, 1
        %p111 = scmp.lt.s32.totalorder %s105, 0
        %s112 = scalar_select %p111, %s105, 0
        %s113 = sadd.s32 %s112, %s110
        %s114 = smul.addr %s113, 8
        %s115 = scalar_lea.vmem %s0, %s114
        %s116 = sadd.s32 %s14, %s15
        %p117 = scmp.lt.s32.totalorder %s116, 0
        %s118 = scalar_select %p117, %s116, 0
        %s119 = smul.u32 16, %s14
        %s120 = ssub.s32 2, %s119
        %s121 = smul.u32 128, %s120
      $region20: #{soft_triple_loss.3} parent=15 // pred_fallthru
        _
    $region16: #{soft_triple_loss.3} parent=5 // pred_fallthru
      _
    %p122 = scmp.le.s32.totalorder 1, %s7
    %p123 = scmp.lt.s32.totalorder %s7, 3
    %p124 = pnand %p122, %p123
    %p125 = pneg %p124
    // Predicated region
    $region21: #{soft_triple_loss.3} parent=5 // pred_check
      _
    $region22: #{soft_triple_loss.3} parent=5 // pred_check_branch
      %127 = sbr.rel (%p124) target = $region24
    $region23: #{soft_triple_loss.3} parent=5 // pred_region
      %s128 = ssub.s32 %s7, 1
      %s129 = sadd.s32 %s16, %s17
      %p130 = scmp.lt.s32.totalorder %s129, 0
      %s131 = scalar_select %p130, %s129, 0
      %s132 = smul.u32 16, %s16
      %s133 = ssub.s32 2, %s132
      %s134 = smul.u32 128, %s133
      %p135 = scmp.lt.s32.totalorder %s132, 1
      %s136 = scalar_select %p135, %s132, 1
      %p137 = scmp.lt.s32.totalorder %s131, 0
      %s138 = scalar_select %p137, %s131, 0
      %s139 = sadd.s32 %s138, %s136
      %s140 = smul.addr %s139, 8
      %s141 = scalar_lea.vmem %s0, %s140
      %p142 = pneg %p53
      %p143 = pneg %p50
      %p144 = pneg %p81
      %p145 = pneg %p78
      %p146 = scmp.lt.s32.totalorder %s16, 0
      %s147 = scalar_select %p146, %s16, 0
      %p148 = scmp.lt.s32.totalorder %s17, 1
      %s149 = scalar_select %p148, %s17, 1
      %s150 = smul.addr %s147, 2
      %s151 = sadd.s32 %s149, %s150
      %s152 = smul.addr %s151, 8
      %s153 = scalar_lea.vmem %s1, %s152
      %s154 = sadd.s32 %s16, %s17
      %p155 = scmp.lt.s32.totalorder %s154, 0
      %s156 = scalar_select %p155, %s154, 0
      %s157 = smul.u32 16, %s16
      %s158 = ssub.s32 2, %s157
      %s159 = smul.u32 128, %s158
      %p160 = scmp.lt.s32.totalorder %s157, 1
      %s161 = scalar_select %p160, %s157, 1
      %p162 = scmp.lt.s32.totalorder %s156, 0
      %s163 = scalar_select %p162, %s156, 0
      %s164 = sadd.s32 %s163, %s161
      %s165 = smul.addr %s164, 8
      %s166 = scalar_lea.vmem %s0, %s165
      %s167 = sadd.s32 %s16, %s17
      %p168 = scmp.lt.s32.totalorder %s167, 0
      %s169 = scalar_select %p168, %s167, 0
      %s170 = smul.u32 16, %s16
      %s171 = ssub.s32 2, %s170
      %s172 = smul.u32 128, %s171
      %p173 = scmp.lt.s32.totalorder %s16, 0
      %s174 = scalar_select %p173, %s16, 0
      %p175 = scmp.lt.s32.totalorder %s17, 1
      %s176 = scalar_select %p175, %s17, 1
      %s177 = smul.addr %s174, 2
      %s178 = sadd.s32 %s176, %s177
      %s179 = smul.addr %s178, 8
      %s180 = scalar_lea.vmem %s1, %s179
      %v181 = vld [vmem:[%s166] sm:$0xff]
      %v182 = vld [vmem:[%s166 + $0x8] sm:$0xff]
      %v183 = vld [vmem:[%s166 + $0x10] sm:$0xff]
      %v184 = vld [vmem:[%s166 + $0x18] sm:$0xff]
      %v185 = vld [vmem:[%s166 + $0x20] sm:$0xff]
      %v186 = vld [vmem:[%s166 + $0x28] sm:$0xff]
      %v187 = vld [vmem:[%s166 + $0x30] sm:$0xff]
      %v188 = vld [vmem:[%s166 + $0x38] sm:$0xff]
      %v189 = vld [vmem:[%s166 + $0x40] sm:$0xff]
      %v190 = vld [vmem:[%s166 + $0x48] sm:$0xff]
      %v191 = vld [vmem:[%s166 + $0x50] sm:$0xff]
      %v192 = vld [vmem:[%s166 + $0x58] sm:$0xff]
      %v193 = vld [vmem:[%s166 + $0x60] sm:$0xff]
      %v194 = vld [vmem:[%s166 + $0x68] sm:$0xff]
      %v195 = vld [vmem:[%s166 + $0x70] sm:$0xff]
      %v196 = vld [vmem:[%s166 + $0x78] sm:$0xff]
      %v197 = vlaneseq
      %v198 = vshrl.u32 %v197, 7
      %v199 = vadd.s32 %v198, 8
      %v200 = vadd.s32 %v198, 16
      %v201 = vadd.s32 %v198, 24
      %v202 = vadd.s32 %v198, 32
      %v203 = vadd.s32 %v198, 40
      %v204 = vadd.s32 %v198, 48
      %v205 = vadd.s32 %v198, 56
      %v206 = vadd.s32 %v198, 64
      %v207 = vadd.s32 %v198, 72
      %v208 = vadd.s32 %v198, 80
      %v209 = vadd.s32 %v198, 88
      %v210 = vadd.s32 %v198, 96
      %v211 = vadd.s32 %v198, 104
      %v212 = vadd.s32 %v198, 112
      %v213 = vadd.s32 %v198, 120
      %v214 = vlaneseq
      %v215 = vand.u32 %v214, 127
      %s216 = smul.u32 %s16, 128
      %v217 = vstv %s216
      %v218 = vadd.s32 %v198, %v217
      %v219 = vadd.s32 %v199, %v217
      %v220 = vadd.s32 %v200, %v217
      %v221 = vadd.s32 %v201, %v217
      %v222 = vadd.s32 %v202, %v217
      %v223 = vadd.s32 %v203, %v217
      %v224 = vadd.s32 %v204, %v217
      %v225 = vadd.s32 %v205, %v217
      %v226 = vadd.s32 %v206, %v217
      %v227 = vadd.s32 %v207, %v217
      %v228 = vadd.s32 %v208, %v217
      %v229 = vadd.s32 %v209, %v217
      %v230 = vadd.s32 %v210, %v217
      %v231 = vadd.s32 %v211, %v217
      %v232 = vadd.s32 %v212, %v217
      %v233 = vadd.s32 %v213, %v217
      %s234 = sadd.s32 %s16, %s17
      %s235 = smul.u32 %s234, 128
      %v236 = vstv %s235
      %v237 = vadd.s32 %v215, %v236
      %v238 = vcvt.s32.f32 %v218
      %v239 = vcvt.s32.f32 %v219
      %v240 = vcvt.s32.f32 %v220
      %v241 = vcvt.s32.f32 %v221
      %v242 = vcvt.s32.f32 %v222
      %v243 = vcvt.s32.f32 %v223
      %v244 = vcvt.s32.f32 %v224
      %v245 = vcvt.s32.f32 %v225
      %v246 = vcvt.s32.f32 %v226
      %v247 = vcvt.s32.f32 %v227
      %v248 = vcvt.s32.f32 %v228
      %v249 = vcvt.s32.f32 %v229
      %v250 = vcvt.s32.f32 %v230
      %v251 = vcvt.s32.f32 %v231
      %v252 = vcvt.s32.f32 %v232
      %v253 = vcvt.s32.f32 %v233
      %v254 = vadd.f32 %v238, 0.5
      %v255 = vadd.f32 %v239, 0.5
      %v256 = vadd.f32 %v240, 0.5
      %v257 = vadd.f32 %v241, 0.5
      %v258 = vadd.f32 %v242, 0.5
      %v259 = vadd.f32 %v243, 0.5
      %v260 = vadd.f32 %v244, 0.5
      %v261 = vadd.f32 %v245, 0.5
      %v262 = vadd.f32 %v246, 0.5
      %v263 = vadd.f32 %v247, 0.5
      %v264 = vadd.f32 %v248, 0.5
      %v265 = vadd.f32 %v249, 0.5
      %v266 = vadd.f32 %v250, 0.5
      %v267 = vadd.f32 %v251, 0.5
      %v268 = vadd.f32 %v252, 0.5
      %v269 = vadd.f32 %v253, 0.5
      %v270 = vmul.f32 %v254, 0.33333334
      %v271 = vmul.f32 %v255, 0.33333334
      %v272 = vmul.f32 %v256, 0.33333334
      %v273 = vmul.f32 %v257, 0.33333334
      %v274 = vmul.f32 %v258, 0.33333334
      %v275 = vmul.f32 %v259, 0.33333334
      %v276 = vmul.f32 %v260, 0.33333334
      %v277 = vmul.f32 %v261, 0.33333334
      %v278 = vmul.f32 %v262, 0.33333334
      %v279 = vmul.f32 %v263, 0.33333334
      %v280 = vmul.f32 %v264, 0.33333334
      %v281 = vmul.f32 %v265, 0.33333334
      %v282 = vmul.f32 %v266, 0.33333334
      %v283 = vmul.f32 %v267, 0.33333334
      %v284 = vmul.f32 %v268, 0.33333334
      %v285 = vmul.f32 %v269, 0.33333334
      %v286 = vfloor.f32 %v270
      %v287 = vfloor.f32 %v271
      %v288 = vfloor.f32 %v272
      %v289 = vfloor.f32 %v273
      %v290 = vfloor.f32 %v274
      %v291 = vfloor.f32 %v275
      %v292 = vfloor.f32 %v276
      %v293 = vfloor.f32 %v277
      %v294 = vfloor.f32 %v278
      %v295 = vfloor.f32 %v279
      %v296 = vfloor.f32 %v280
      %v297 = vfloor.f32 %v281
      %v298 = vfloor.f32 %v282
      %v299 = vfloor.f32 %v283
      %v300 = vfloor.f32 %v284
      %v301 = vfloor.f32 %v285
      %v302 = vcvt.s32.f32 %v237
      %v303 = vadd.f32 %v302, 0.5
      %v304 = vmul.f32 %v303, 0.33333334
      %v305 = vfloor.f32 %v304
      %vm306 = vcmp.eq.f32.partialorder %v286, %v305
      %vm307 = vcmp.eq.f32.partialorder %v287, %v305
      %vm308 = vcmp.eq.f32.partialorder %v288, %v305
      %vm309 = vcmp.eq.f32.partialorder %v289, %v305
      %vm310 = vcmp.eq.f32.partialorder %v290, %v305
      %vm311 = vcmp.eq.f32.partialorder %v291, %v305
      %vm312 = vcmp.eq.f32.partialorder %v292, %v305
      %vm313 = vcmp.eq.f32.partialorder %v293, %v305
      %vm314 = vcmp.eq.f32.partialorder %v294, %v305
      %vm315 = vcmp.eq.f32.partialorder %v295, %v305
      %vm316 = vcmp.eq.f32.partialorder %v296, %v305
      %vm317 = vcmp.eq.f32.partialorder %v297, %v305
      %vm318 = vcmp.eq.f32.partialorder %v298, %v305
      %vm319 = vcmp.eq.f32.partialorder %v299, %v305
      %vm320 = vcmp.eq.f32.partialorder %v300, %v305
      %vm321 = vcmp.eq.f32.partialorder %v301, %v305
      %vm322 = vcmp.gt.s32.totalorder %v237, %v218
      %vm323 = vcmp.gt.s32.totalorder %v237, %v219
      %vm324 = vcmp.gt.s32.totalorder %v237, %v220
      %vm325 = vcmp.gt.s32.totalorder %v237, %v221
      %vm326 = vcmp.gt.s32.totalorder %v237, %v222
      %vm327 = vcmp.gt.s32.totalorder %v237, %v223
      %vm328 = vcmp.gt.s32.totalorder %v237, %v224
      %vm329 = vcmp.gt.s32.totalorder %v237, %v225
      %vm330 = vcmp.gt.s32.totalorder %v237, %v226
      %vm331 = vcmp.gt.s32.totalorder %v237, %v227
      %vm332 = vcmp.gt.s32.totalorder %v237, %v228
      %vm333 = vcmp.gt.s32.totalorder %v237, %v229
      %vm334 = vcmp.gt.s32.totalorder %v237, %v230
      %vm335 = vcmp.gt.s32.totalorder %v237, %v231
      %vm336 = vcmp.gt.s32.totalorder %v237, %v232
      %vm337 = vcmp.gt.s32.totalorder %v237, %v233
      %vm338 = vmand %vm306, %vm322
      %vm339 = vmand %vm307, %vm323
      %vm340 = vmand %vm308, %vm324
      %vm341 = vmand %vm309, %vm325
      %vm342 = vmand %vm310, %vm326
      %vm343 = vmand %vm311, %vm327
      %vm344 = vmand %vm312, %vm328
      %vm345 = vmand %vm313, %vm329
      %vm346 = vmand %vm314, %vm330
      %vm347 = vmand %vm315, %vm331
      %vm348 = vmand %vm316, %vm332
      %vm349 = vmand %vm317, %vm333
      %vm350 = vmand %vm318, %vm334
      %vm351 = vmand %vm319, %vm335
      %vm352 = vmand %vm320, %vm336
      %vm353 = vmand %vm321, %vm337
      %vm354 = vcmp.lt.s32.totalorder %v218, 12
      %vm355 = vcmp.lt.s32.totalorder %v219, 12
      %vm356 = vcmp.lt.s32.totalorder %v220, 12
      %vm357 = vcmp.lt.s32.totalorder %v221, 12
      %vm358 = vcmp.lt.s32.totalorder %v222, 12
      %vm359 = vcmp.lt.s32.totalorder %v223, 12
      %vm360 = vcmp.lt.s32.totalorder %v224, 12
      %vm361 = vcmp.lt.s32.totalorder %v225, 12
      %vm362 = vcmp.lt.s32.totalorder %v226, 12
      %vm363 = vcmp.lt.s32.totalorder %v227, 12
      %vm364 = vcmp.lt.s32.totalorder %v228, 12
      %vm365 = vcmp.lt.s32.totalorder %v229, 12
      %vm366 = vcmp.lt.s32.totalorder %v230, 12
      %vm367 = vcmp.lt.s32.totalorder %v231, 12
      %vm368 = vcmp.lt.s32.totalorder %v232, 12
      %vm369 = vcmp.lt.s32.totalorder %v233, 12
      %vm370 = vmand %vm338, %vm354
      %vm371 = vmand %vm339, %vm355
      %vm372 = vmand %vm340, %vm356
      %vm373 = vmand %vm341, %vm357
      %vm374 = vmand %vm342, %vm358
      %vm375 = vmand %vm343, %vm359
      %vm376 = vmand %vm344, %vm360
      %vm377 = vmand %vm345, %vm361
      %vm378 = vmand %vm346, %vm362
      %vm379 = vmand %vm347, %vm363
      %vm380 = vmand %vm348, %vm364
      %vm381 = vmand %vm349, %vm365
      %vm382 = vmand %vm350, %vm366
      %vm383 = vmand %vm351, %vm367
      %vm384 = vmand %vm352, %vm368
      %vm385 = vmand %vm353, %vm369
      %vm386 = vcmp.lt.s32.totalorder %v237, 12
      %vm387 = vmand %vm370, %vm386
      %vm388 = vmand %vm371, %vm386
      %vm389 = vmand %vm372, %vm386
      %vm390 = vmand %vm373, %vm386
      %vm391 = vmand %vm374, %vm386
      %vm392 = vmand %vm375, %vm386
      %vm393 = vmand %vm376, %vm386
      %vm394 = vmand %vm377, %vm386
      %vm395 = vmand %vm378, %vm386
      %vm396 = vmand %vm379, %vm386
      %vm397 = vmand %vm380, %vm386
      %vm398 = vmand %vm381, %vm386
      %vm399 = vmand %vm382, %vm386
      %vm400 = vmand %vm383, %vm386
      %vm401 = vmand %vm384, %vm386
      %vm402 = vmand %vm385, %vm386
      %v403 = vmul.f32 %v181, 2.0
      %v404 = vmul.f32 %v182, 2.0
      %v405 = vmul.f32 %v183, 2.0
      %v406 = vmul.f32 %v184, 2.0
      %v407 = vmul.f32 %v185, 2.0
      %v408 = vmul.f32 %v186, 2.0
      %v409 = vmul.f32 %v187, 2.0
      %v410 = vmul.f32 %v188, 2.0
      %v411 = vmul.f32 %v189, 2.0
      %v412 = vmul.f32 %v190, 2.0
      %v413 = vmul.f32 %v191, 2.0
      %v414 = vmul.f32 %v192, 2.0
      %v415 = vmul.f32 %v193, 2.0
      %v416 = vmul.f32 %v194, 2.0
      %v417 = vmul.f32 %v195, 2.0
      %v418 = vmul.f32 %v196, 2.0
      %v419 = vsub.f32 2.00001, %v403
      %v420 = vsub.f32 2.00001, %v404
      %v421 = vsub.f32 2.00001, %v405
      %v422 = vsub.f32 2.00001, %v406
      %v423 = vsub.f32 2.00001, %v407
      %v424 = vsub.f32 2.00001, %v408
      %v425 = vsub.f32 2.00001, %v409
      %v426 = vsub.f32 2.00001, %v410
      %v427 = vsub.f32 2.00001, %v411
      %v428 = vsub.f32 2.00001, %v412
      %v429 = vsub.f32 2.00001, %v413
      %v430 = vsub.f32 2.00001, %v414
      %v431 = vsub.f32 2.00001, %v415
      %v432 = vsub.f32 2.00001, %v416
      %v433 = vsub.f32 2.00001, %v417
      %v434 = vsub.f32 2.00001, %v418
      %v435 = vsel %vm387, %v419, 0.0
      %v436 = vsel %vm388, %v420, 0.0
      %v437 = vsel %vm389, %v421, 0.0
      %v438 = vsel %vm390, %v422, 0.0
      %v439 = vsel %vm391, %v423, 0.0
      %v440 = vsel %vm392, %v424, 0.0
      %v441 = vsel %vm393, %v425, 0.0
      %v442 = vsel %vm394, %v426, 0.0
      %v443 = vsel %vm395, %v427, 0.0
      %v444 = vsel %vm396, %v428, 0.0
      %v445 = vsel %vm397, %v429, 0.0
      %v446 = vsel %vm398, %v430, 0.0
      %v447 = vsel %vm399, %v431, 0.0
      %v448 = vsel %vm400, %v432, 0.0
      %v449 = vsel %vm401, %v433, 0.0
      %v450 = vsel %vm402, %v434, 0.0
      %v451 = vmax.f32 %v435, 0.0
      %v452 = vmax.f32 %v436, 0.0
      %v453 = vmax.f32 %v437, 0.0
      %v454 = vmax.f32 %v438, 0.0
      %v455 = vmax.f32 %v439, 0.0
      %v456 = vmax.f32 %v440, 0.0
      %v457 = vmax.f32 %v441, 0.0
      %v458 = vmax.f32 %v442, 0.0
      %v459 = vmax.f32 %v443, 0.0
      %v460 = vmax.f32 %v444, 0.0
      %v461 = vmax.f32 %v445, 0.0
      %v462 = vmax.f32 %v446, 0.0
      %v463 = vmax.f32 %v447, 0.0
      %v464 = vmax.f32 %v448, 0.0
      %v465 = vmax.f32 %v449, 0.0
      %v466 = vmax.f32 %v450, 0.0
      %v467 = vrsqrt.pop %v451
      %v468 = vmul.f32 %v451, %v467
      %vm469 = vcmp.eq.f32.partialorder %v451, inf
      %v470 = vsel %vm469, %v451, %v468
      %vm471 = vcmp.eq.f32.partialorder %v451, 0.0
      %v472 = vand.u32 %v451, 2147483648
      %v473 = vsel %vm471, %v472, %v470
      %v474 = vrsqrt.pop %v452
      %v475 = vmul.f32 %v452, %v474
      %vm476 = vcmp.eq.f32.partialorder %v452, inf
      %v477 = vsel %vm476, %v452, %v475
      %vm478 = vcmp.eq.f32.partialorder %v452, 0.0
      %v479 = vand.u32 %v452, 2147483648
      %v480 = vsel %vm478, %v479, %v477
      %v481 = vrsqrt.pop %v453
      %v482 = vmul.f32 %v453, %v481
      %vm483 = vcmp.eq.f32.partialorder %v453, inf
      %v484 = vsel %vm483, %v453, %v482
      %vm485 = vcmp.eq.f32.partialorder %v453, 0.0
      %v486 = vand.u32 %v453, 2147483648
      %v487 = vsel %vm485, %v486, %v484
      %v488 = vrsqrt.pop %v454
      %v489 = vmul.f32 %v454, %v488
      %vm490 = vcmp.eq.f32.partialorder %v454, inf
      %v491 = vsel %vm490, %v454, %v489
      %vm492 = vcmp.eq.f32.partialorder %v454, 0.0
      %v493 = vand.u32 %v454, 2147483648
      %v494 = vsel %vm492, %v493, %v491
      %v495 = vrsqrt.pop %v455
      %v496 = vmul.f32 %v455, %v495
      %vm497 = vcmp.eq.f32.partialorder %v455, inf
      %v498 = vsel %vm497, %v455, %v496
      %vm499 = vcmp.eq.f32.partialorder %v455, 0.0
      %v500 = vand.u32 %v455, 2147483648
      %v501 = vsel %vm499, %v500, %v498
      %v502 = vrsqrt.pop %v456
      %v503 = vmul.f32 %v456, %v502
      %vm504 = vcmp.eq.f32.partialorder %v456, inf
      %v505 = vsel %vm504, %v456, %v503
      %vm506 = vcmp.eq.f32.partialorder %v456, 0.0
      %v507 = vand.u32 %v456, 2147483648
      %v508 = vsel %vm506, %v507, %v505
      %v509 = vrsqrt.pop %v457
      %v510 = vmul.f32 %v457, %v509
      %vm511 = vcmp.eq.f32.partialorder %v457, inf
      %v512 = vsel %vm511, %v457, %v510
      %vm513 = vcmp.eq.f32.partialorder %v457, 0.0
      %v514 = vand.u32 %v457, 2147483648
      %v515 = vsel %vm513, %v514, %v512
      %v516 = vrsqrt.pop %v458
      %v517 = vmul.f32 %v458, %v516
      %vm518 = vcmp.eq.f32.partialorder %v458, inf
      %v519 = vsel %vm518, %v458, %v517
      %vm520 = vcmp.eq.f32.partialorder %v458, 0.0
      %v521 = vand.u32 %v458, 2147483648
      %v522 = vsel %vm520, %v521, %v519
      %v523 = vrsqrt.pop %v459
      %v524 = vmul.f32 %v459, %v523
      %vm525 = vcmp.eq.f32.partialorder %v459, inf
      %v526 = vsel %vm525, %v459, %v524
      %vm527 = vcmp.eq.f32.partialorder %v459, 0.0
      %v528 = vand.u32 %v459, 2147483648
      %v529 = vsel %vm527, %v528, %v526
      %v530 = vrsqrt.pop %v460
      %v531 = vmul.f32 %v460, %v530
      %vm532 = vcmp.eq.f32.partialorder %v460, inf
      %v533 = vsel %vm532, %v460, %v531
      %vm534 = vcmp.eq.f32.partialorder %v460, 0.0
      %v535 = vand.u32 %v460, 2147483648
      %v536 = vsel %vm534, %v535, %v533
      %v537 = vrsqrt.pop %v461
      %v538 = vmul.f32 %v461, %v537
      %vm539 = vcmp.eq.f32.partialorder %v461, inf
      %v540 = vsel %vm539, %v461, %v538
      %vm541 = vcmp.eq.f32.partialorder %v461, 0.0
      %v542 = vand.u32 %v461, 2147483648
      %v543 = vsel %vm541, %v542, %v540
      %v544 = vrsqrt.pop %v462
      %v545 = vmul.f32 %v462, %v544
      %vm546 = vcmp.eq.f32.partialorder %v462, inf
      %v547 = vsel %vm546, %v462, %v545
      %vm548 = vcmp.eq.f32.partialorder %v462, 0.0
      %v549 = vand.u32 %v462, 2147483648
      %v550 = vsel %vm548, %v549, %v547
      %v551 = vrsqrt.pop %v463
      %v552 = vmul.f32 %v463, %v551
      %vm553 = vcmp.eq.f32.partialorder %v463, inf
      %v554 = vsel %vm553, %v463, %v552
      %vm555 = vcmp.eq.f32.partialorder %v463, 0.0
      %v556 = vand.u32 %v463, 2147483648
      %v557 = vsel %vm555, %v556, %v554
      %v558 = vrsqrt.pop %v464
      %v559 = vmul.f32 %v464, %v558
      %vm560 = vcmp.eq.f32.partialorder %v464, inf
      %v561 = vsel %vm560, %v464, %v559
      %vm562 = vcmp.eq.f32.partialorder %v464, 0.0
      %v563 = vand.u32 %v464, 2147483648
      %v564 = vsel %vm562, %v563, %v561
      %v565 = vrsqrt.pop %v465
      %v566 = vmul.f32 %v465, %v565
      %vm567 = vcmp.eq.f32.partialorder %v465, inf
      %v568 = vsel %vm567, %v465, %v566
      %vm569 = vcmp.eq.f32.partialorder %v465, 0.0
      %v570 = vand.u32 %v465, 2147483648
      %v571 = vsel %vm569, %v570, %v568
      %v572 = vrsqrt.pop %v466
      %v573 = vmul.f32 %v466, %v572
      %vm574 = vcmp.eq.f32.partialorder %v466, inf
      %v575 = vsel %vm574, %v466, %v573
      %vm576 = vcmp.eq.f32.partialorder %v466, 0.0
      %v577 = vand.u32 %v466, 2147483648
      %v578 = vsel %vm576, %v577, %v575
      %v579 = vadd.f32 %v473, %v480
      %v580 = vadd.f32 %v579, %v487
      %v581 = vadd.f32 %v580, %v494
      %v582 = vadd.f32 %v581, %v501
      %v583 = vadd.f32 %v582, %v508
      %v584 = vadd.f32 %v583, %v515
      %v585 = vadd.f32 %v584, %v522
      %v586 = vadd.f32 %v585, %v529
      %v587 = vadd.f32 %v586, %v536
      %v588 = vadd.f32 %v587, %v543
      %v589 = vadd.f32 %v588, %v550
      %v590 = vadd.f32 %v589, %v557
      %v591 = vadd.f32 %v590, %v564
      %v592 = vadd.f32 %v591, %v571
      %v593 = vadd.f32 %v592, %v578
      %594 = vadd.xlane.f32.xlu0 %v593
      %v595 = vpop.xlane.xlu0 %594
      %v596 = vrot.slane %v595, 4
      %v597 = vadd.f32 %v595, %v596
      %v598 = vrot.slane %v597, 2
      %v599 = vadd.f32 %v597, %v598
      %v600 = vrot.slane %v599, 1
      %v601 = vadd.f32 %v599, %v600
      %s602 = vtos %v601
      %v603 = vstv %s602
      %604 = vst [vmem:[%s180] sm:$0xff] %v603
      %p605 = scmp.lt.s32.totalorder %s16, 0
      %s606 = scalar_select %p605, %s16, 0
      %p607 = scmp.lt.s32.totalorder %s17, 1
      %s608 = scalar_select %p607, %s17, 1
      %s609 = smul.addr %s606, 2
      %s610 = sadd.s32 %s608, %s609
      %s611 = smul.addr %s610, 8
      %s612 = scalar_lea.vmem %s1, %s611
      // Predicated region
      $region25: #{soft_triple_loss.3} parent=23 // pred_check
        %p613 = pneg %p78
      $region26: #{soft_triple_loss.3} parent=23 // pred_check_branch
        %615 = sbr.rel (%p613) target = $region28
      $region27: #{soft_triple_loss.3} parent=23 // pred_region
        _
      $region28: #{soft_triple_loss.3} parent=23 // pred_fallthru
        _
    $region24: #{soft_triple_loss.3} parent=5 // pred_fallthru
      _
    %p616 = scmp.le.s32.totalorder 2, %s7
    // Predicated region
    $region29: #{soft_triple_loss.3} parent=5 // pred_check
      %p617 = pneg %p616
    $region30: #{soft_triple_loss.3} parent=5 // pred_check_branch
      %619 = sbr.rel (%p617) target = $region32
    $region31: #{soft_triple_loss.3} parent=5 // pred_region
      %s620 = ssub.s32 %s7, 2
      // Predicated region
      $region33: #{soft_triple_loss.3} parent=31 // pred_check
        %p621 = pneg %p84
      $region34: #{soft_triple_loss.3} parent=31 // pred_check_branch
        %623 = sbr.rel (%p621) target = $region36
      $region35: #{soft_triple_loss.3} parent=31 // pred_region
        %p624 = scmp.lt.s32.totalorder %s18, 0
        %s625 = scalar_select %p624, %s18, 0
        %p626 = scmp.lt.s32.totalorder %s19, 1
        %s627 = scalar_select %p626, %s19, 1
        %s628 = smul.addr %s625, 2
        %s629 = sadd.s32 %s627, %s628
        %s630 = smul.addr %s629, 8
        %s631 = scalar_lea.vmem %s1, %s630
      $region36: #{soft_triple_loss.3} parent=31 // pred_fallthru
        _
    $region32: #{soft_triple_loss.3} parent=5 // pred_fallthru
      _
  $region6: #{soft_triple_loss.3} parent=0 // loop_footer
    %s11 = sadd.s32 1, %s7
  $region7: #{soft_triple_loss.3} parent=0 // loop_footer_branch
    %6 = sbr.rel target = $region3
  $region8: #{soft_triple_loss.3} parent=0 // loop_exit
    _

</llo_original>
